<compile_context>
chip_gen: v6e
topology: v6e:2x2x1
jax: 0.10.0
libtpu: 0.0.40
codegen_flags: <defaults>
</compile_context>

<pallas_src>
import functools

import jax
import jax.numpy as jnp
import numpy as np
from jax import lax
from jax.experimental import pallas as pl
from jax.experimental.pallas import tpu as pltpu


def _round_up(a: int, b: int) -> int:
    return (a + b - 1) // b * b


def _pick_tk(K: int, tk_max: int) -> int:
    """K-tile must divide K exactly (we never pad the contraction axis)."""
    if K % 128 != 0 or K <= tk_max:
        # Not 128-aligned (or small): use the whole K as a single block
        # (block_shape == full dim satisfies the (8,128) rule).
        return K
    for cand in range(tk_max, 0, -128):
        if K % cand == 0:
            return cand
    return K  # no 128-multiple divisor <= tk_max; fall back to one K block


def _linear_kernel(x_ref, wf_ref, wt_ref, bf_ref, bt_ref, o_ref, acc_ref,
                   *, nf_tiles):
    # x_ref : (tm, tk)   input tile
    # wf_ref: (tn, tk)   frozen-weight tile  (PyTorch (N, K) layout)
    # wt_ref: (tn, tk)   trainable-weight tile
    # bf_ref: (1, tn)    frozen-bias tile
    # bt_ref: (1, tn)    trainable-bias tile
    # o_ref : (tm, tn)   output tile
    # acc_ref: (tm, tn)  float32 accumulator scratch
    j = pl.program_id(1)
    k = pl.program_id(2)
    nk = pl.num_programs(2)
    is_frozen = j < nf_tiles

    @pl.when(k == 0)
    def _():
        acc_ref[...] = jnp.zeros_like(acc_ref)

    # y = x @ W^T : contract the K axis of x (tm, tk) with the K axis of the
    # (tn, tk) weight tile directly on the MXU (no transposed copy of W).
    dims = (((1,), (1,)), ((), ()))

    @pl.when(is_frozen)
    def _():
        acc_ref[...] += lax.dot_general(
            x_ref[...], wf_ref[...], dims, preferred_element_type=jnp.float32)

    @pl.when(jnp.logical_not(is_frozen))
    def _():
        acc_ref[...] += lax.dot_general(
            x_ref[...], wt_ref[...], dims, preferred_element_type=jnp.float32)

    # Bias is added once, in the finalize step only (off the inner K loop).
    @pl.when(k == nk - 1)
    def _():
        b = jnp.where(is_frozen, bf_ref[...], bt_ref[...]).astype(jnp.float32)
        o_ref[...] = (acc_ref[...] + b).astype(o_ref.dtype)


def partial_frozen_linear(x, frozen_weight, weight, frozen_bias, bias,
                          *, tm_max=256, tn_max=256, tk_max=512):
    """Pallas TPU implementation of PartialFrozenLinear.forward.

    x             : (..., in_features)
    frozen_weight : (num_frozen, in_features)         -- PyTorch (N, K) layout
    weight        : (out_features - num_frozen, in_features)
    frozen_bias   : (num_frozen,) or None
    bias          : (out_features - num_frozen,) or None
    """
    Nf, K = frozen_weight.shape
    Nt, K2 = weight.shape
    assert K == K2 and x.shape[-1] == K
    N = Nf + Nt

    # Per the PyTorch module the two bias pieces are jointly present or absent.
    if (frozen_bias is None) != (bias is None):
        raise ValueError(
            "frozen_bias and bias must both be provided or both be None "
            "(PartialFrozenLinear never has only one of them).")
    has_bias = frozen_bias is not None

    lead = x.shape[:-1]
    M = int(np.prod(lead)) if lead else 1

    # ---- tile sizes --------------------------------------------------------
    tm = min(tm_max, _round_up(max(M, 1), 8))           # sublane dim, mult of 8
    tn = min(tn_max, _round_up(max(Nf, Nt, 1), 128))    # lane-dense, mult of 128
    tk = _pick_tk(K, tk_max)                            # divides K exactly

    M_pad = _round_up(max(M, 1), tm)
    Nf_pad = _round_up(max(Nf, 1), tn)
    Nt_pad = _round_up(max(Nt, 1), tn)
    nf_tiles = Nf_pad // tn
    nt_tiles = Nt_pad // tn
    nk = K // tk

    # ---- pad ragged edges (no-op copies are elided when already aligned) ---
    x2 = x.reshape(M, K)
    if M_pad != M:
        x2 = jnp.pad(x2, ((0, M_pad - M), (0, 0)))
    wf = (frozen_weight if Nf_pad == Nf
          else jnp.pad(frozen_weight, ((0, Nf_pad - Nf), (0, 0))))
    wt = (weight if Nt_pad == Nt
          else jnp.pad(weight, ((0, Nt_pad - Nt), (0, 0))))
    if has_bias:
        bf = jnp.pad(frozen_bias, (0, Nf_pad - Nf)).reshape(1, Nf_pad)
        bt = jnp.pad(bias, (0, Nt_pad - Nt)).reshape(1, Nt_pad)
    else:
        bf = jnp.zeros((1, Nf_pad), dtype=x.dtype)
        bt = jnp.zeros((1, Nt_pad), dtype=x.dtype)

    # ---- index maps --------------------------------------------------------
    # Grid = (M tiles, frozen-N tiles + trainable-N tiles, K tiles).
    # When a weight slice is inactive for the current N tile, its block index
    # is parked (frozen: on its last block; trainable: on block (0,0), which
    # doubles as a prefetch) so the pipeline dedups instead of streaming
    # tiles that would never feed the MXU.
    def x_map(i, j, k):
        return (i, k)

    def wf_map(i, j, k):
        f = j < nf_tiles
        return (jnp.where(f, j, nf_tiles - 1), jnp.where(f, k, nk - 1))

    def wt_map(i, j, k):
        t = j >= nf_tiles
        return (jnp.where(t, j - nf_tiles, 0), jnp.where(t, k, 0))

    def bf_map(i, j, k):
        return (0, jnp.where(j < nf_tiles, j, nf_tiles - 1))

    def bt_map(i, j, k):
        return (0, jnp.where(j >= nf_tiles, j - nf_tiles, 0))

    def o_map(i, j, k):
        return (i, j)

    grid = (M_pad // tm, nf_tiles + nt_tiles, nk)

    out = pl.pallas_call(
        functools.partial(_linear_kernel, nf_tiles=nf_tiles),
        out_shape=jax.ShapeDtypeStruct((M_pad, Nf_pad + Nt_pad), x.dtype),
        grid_spec=pltpu.PrefetchScalarGridSpec(
            num_scalar_prefetch=0,
            grid=grid,
            in_specs=[
                pl.BlockSpec((tm, tk), x_map),
                pl.BlockSpec((tn, tk), wf_map),
                pl.BlockSpec((tn, tk), wt_map),
                pl.BlockSpec((1, tn), bf_map),
                pl.BlockSpec((1, tn), bt_map),
            ],
            out_specs=pl.BlockSpec((tm, tn), o_map),
            scratch_shapes=[pltpu.VMEM((tm, tn), jnp.float32)],
        ),
        compiler_params=pltpu.CompilerParams(
            # M / N shard across TensorCores (2 per chip on v7x); K is the
            # reduction axis and stays "arbitrary" (and last).
            dimension_semantics=("parallel", "parallel", "arbitrary"),
            # Explicit budget: ~4 MiB of double-buffered tiles at the default
            # tile sizes -- fits v5e/v6e/v7x scoped VMEM with headroom.
            vmem_limit_bytes=32 * 1024 * 1024,
        ),
    )(x2, wf, wt, bf, bt)

    # ---- strip padding -----------------------------------------------------
    out = out[:M]
    if Nf_pad == Nf and Nt_pad == Nt:
        y = out                       # already contiguous [frozen | trainable]
    else:
        y = jnp.concatenate([out[:, :Nf], out[:, Nf_pad:Nf_pad + Nt]], axis=1)
    return y.reshape(*lead, N)


def _check(x, frozen_weight, weight, frozen_bias, bias, **tile_overrides):
    y = partial_frozen_linear(x, frozen_weight, weight, frozen_bias, bias,
                              **tile_overrides)
    y = jax.block_until_ready(y)
    # float64 host reference of F.linear(x, cat(Wf, Wt), cat(bf, bt)).
    w_full = np.concatenate([np.asarray(frozen_weight, np.float64),
                             np.asarray(weight, np.float64)], axis=0)
    b_full = np.concatenate([np.asarray(frozen_bias, np.float64),
                             np.asarray(bias, np.float64)], axis=0)
    x64 = np.asarray(x, np.float64).reshape(-1, x.shape[-1])
    y_ref = (x64 @ w_full.T + b_full).reshape(*x.shape[:-1], w_full.shape[0])
    np.testing.assert_allclose(np.asarray(y, np.float64), y_ref,
                               rtol=1e-4, atol=1e-4)


if __name__ == "__main__":
    key = jax.random.PRNGKey(0)

    # --- config 1: the module's small demo shapes (single-block fast path) --
    batch, seq = 2, 8
    in_features, out_features, num_frozen = 32, 64, 16
    k_w, k_b, k_x, k2_w, k2_b, k2_x = jax.random.split(key, 6)

    ori_weight = jax.random.normal(k_w, (out_features, in_features),
                                   dtype=jnp.float32) * 0.05
    ori_bias = jax.random.normal(k_b, (out_features,), dtype=jnp.float32) * 0.05
    frozen_weight = ori_weight[:num_frozen]
    weight = ori_weight[num_frozen:]
    frozen_bias = ori_bias[:num_frozen]
    bias = ori_bias[num_frozen:]
    x = jax.random.normal(k_x, (batch, seq, in_features), dtype=jnp.float32)
    _check(x, frozen_weight, weight, frozen_bias, bias)

    # --- config 2: small shapes with tile overrides that force a real tiled
    #     grid (2 M-tiles x 2 N-tiles x 2 K-steps) and ragged N padding ------
    in2, out2, frozen2 = 256, 192, 80
    w2 = jax.random.normal(k2_w, (out2, in2), dtype=jnp.float32) * 0.05
    b2 = jax.random.normal(k2_b, (out2,), dtype=jnp.float32) * 0.05
    x2 = jax.random.normal(k2_x, (batch, seq, in2), dtype=jnp.float32)
    _check(x2, w2[:frozen2], w2[frozen2:], b2[:frozen2], b2[frozen2:],
           tm_max=8, tn_max=128, tk_max=128)

    print("KERNEL_OK")
</pallas_src>

<mosaic_0001>
module attributes {stable_mosaic.version = 11 : i64} {
  func.func @_linear_kernel(%arg0: i32, %arg1: i32, %arg2: i32, %arg3: memref<16x32xf32, #tpu.memory_space<vmem>>, %arg4: memref<128x32xf32, #tpu.memory_space<vmem>>, %arg5: memref<128x32xf32, #tpu.memory_space<vmem>>, %arg6: memref<1x128xf32, #tpu.memory_space<vmem>>, %arg7: memref<1x128xf32, #tpu.memory_space<vmem>>, %arg8: memref<16x128xf32, #tpu.memory_space<vmem>>, %arg9: memref<16x128xf32, #tpu.memory_space<vmem>>) attributes {dimension_semantics = [#tpu.dimension_semantics<parallel>, #tpu.dimension_semantics<parallel>, #tpu.dimension_semantics<arbitrary>], iteration_bounds = array<i64: 1, 2, 1>, scalar_prefetch = 0 : i64, scratch_operands = 1 : i64, tpu.core_type = #tpu.core_type<tc>, window_params = [{transform_indices = @transform_0, window_bounds = array<i64: 16, 32>}, {transform_indices = @transform_1, window_bounds = array<i64: 128, 32>}, {transform_indices = @transform_2, window_bounds = array<i64: 128, 32>}, {transform_indices = @transform_3, window_bounds = array<i64: 1, 128>}, {transform_indices = @transform_4, window_bounds = array<i64: 1, 128>}, {transform_indices = @transform_5, window_bounds = array<i64: 16, 128>}]} {
    %c1_i32 = arith.constant 1 : i32
    %0 = arith.cmpi slt, %arg1, %c1_i32 : i32
    %c0_i32 = arith.constant 0 : i32
    %1 = arith.cmpi eq, %arg2, %c0_i32 : i32
    %2 = arith.extui %1 : i1 to i32
    %c0_i32_0 = arith.constant 0 : i32
    %3 = arith.cmpi ne, %2, %c0_i32_0 : i32
    scf.if %3 {
      %cst = arith.constant 0.000000e+00 : f32
      %12 = vector.broadcast %cst : f32 to vector<16x128xf32>
      %c0 = arith.constant 0 : index
      %c0_5 = arith.constant 0 : index
      %13 = vector.load %arg9[%c0, %c0_5] : memref<16x128xf32, #tpu.memory_space<vmem>>, vector<16x128xf32>
      tpu.vector_store %arg9[%c0, %c0_5], %12 {strides = array<i32>} : memref<16x128xf32, #tpu.memory_space<vmem>>, vector<16x128xf32>,
    } else {
    }
    %4 = arith.extui %0 : i1 to i32
    %c0_i32_1 = arith.constant 0 : i32
    %5 = arith.cmpi ne, %4, %c0_i32_1 : i32
    scf.if %5 {
      %c0 = arith.constant 0 : index
      %c0_5 = arith.constant 0 : index
      %12 = vector.load %arg9[%c0, %c0_5] : memref<16x128xf32, #tpu.memory_space<vmem>>, vector<16x128xf32>
      %c0_6 = arith.constant 0 : index
      %c0_7 = arith.constant 0 : index
      %13 = vector.load %arg3[%c0_6, %c0_7] : memref<16x32xf32, #tpu.memory_space<vmem>>, vector<16x32xf32>
      %c0_8 = arith.constant 0 : index
      %c0_9 = arith.constant 0 : index
      %14 = vector.load %arg4[%c0_8, %c0_9] : memref<128x32xf32, #tpu.memory_space<vmem>>, vector<128x32xf32>
      %cst = arith.constant dense<0.000000e+00> : vector<16x128xf32>
      %15 = tpu.matmul %13, %14, %cst {dimension_numbers = #tpu.dot_dimension_numbers<[1], [1], [0], [0], [0, 0, 1, 0], [], []>} : vector<16x32xf32>, vector<128x32xf32>, vector<16x128xf32> -> vector<16x128xf32>
      %16 = arith.addf %12, %15 : vector<16x128xf32>
      %c0_10 = arith.constant 0 : index
      %c0_11 = arith.constant 0 : index
      %17 = vector.load %arg9[%c0_10, %c0_11] : memref<16x128xf32, #tpu.memory_space<vmem>>, vector<16x128xf32>
      tpu.vector_store %arg9[%c0_10, %c0_11], %16 {strides = array<i32>} : memref<16x128xf32, #tpu.memory_space<vmem>>, vector<16x128xf32>,
    } else {
    }
    %true = arith.constant true
    %6 = arith.xori %0, %true : i1
    %7 = arith.extui %6 : i1 to i32
    %c0_i32_2 = arith.constant 0 : i32
    %8 = arith.cmpi ne, %7, %c0_i32_2 : i32
    scf.if %8 {
      %c0 = arith.constant 0 : index
      %c0_5 = arith.constant 0 : index
      %12 = vector.load %arg9[%c0, %c0_5] : memref<16x128xf32, #tpu.memory_space<vmem>>, vector<16x128xf32>
      %c0_6 = arith.constant 0 : index
      %c0_7 = arith.constant 0 : index
      %13 = vector.load %arg3[%c0_6, %c0_7] : memref<16x32xf32, #tpu.memory_space<vmem>>, vector<16x32xf32>
      %c0_8 = arith.constant 0 : index
      %c0_9 = arith.constant 0 : index
      %14 = vector.load %arg5[%c0_8, %c0_9] : memref<128x32xf32, #tpu.memory_space<vmem>>, vector<128x32xf32>
      %cst = arith.constant dense<0.000000e+00> : vector<16x128xf32>
      %15 = tpu.matmul %13, %14, %cst {dimension_numbers = #tpu.dot_dimension_numbers<[1], [1], [0], [0], [0, 0, 1, 0], [], []>} : vector<16x32xf32>, vector<128x32xf32>, vector<16x128xf32> -> vector<16x128xf32>
      %16 = arith.addf %12, %15 : vector<16x128xf32>
      %c0_10 = arith.constant 0 : index
      %c0_11 = arith.constant 0 : index
      %17 = vector.load %arg9[%c0_10, %c0_11] : memref<16x128xf32, #tpu.memory_space<vmem>>, vector<16x128xf32>
      tpu.vector_store %arg9[%c0_10, %c0_11], %16 {strides = array<i32>} : memref<16x128xf32, #tpu.memory_space<vmem>>, vector<16x128xf32>,
    } else {
    }
    %c0_i32_3 = arith.constant 0 : i32
    %9 = arith.cmpi eq, %arg2, %c0_i32_3 : i32
    %10 = arith.extui %9 : i1 to i32
    %c0_i32_4 = arith.constant 0 : i32
    %11 = arith.cmpi ne, %10, %c0_i32_4 : i32
    scf.if %11 {
      %c0 = arith.constant 0 : index
      %c0_5 = arith.constant 0 : index
      %12 = vector.load %arg6[%c0, %c0_5] : memref<1x128xf32, #tpu.memory_space<vmem>>, vector<1x128xf32>
      %c0_6 = arith.constant 0 : index
      %c0_7 = arith.constant 0 : index
      %13 = vector.load %arg7[%c0_6, %c0_7] : memref<1x128xf32, #tpu.memory_space<vmem>>, vector<1x128xf32>
      %14 = arith.select %0, %12, %13 : vector<1x128xf32>
      %c0_8 = arith.constant 0 : index
      %c0_9 = arith.constant 0 : index
      %15 = vector.load %arg9[%c0_8, %c0_9] : memref<16x128xf32, #tpu.memory_space<vmem>>, vector<16x128xf32>
      %16 = vector.broadcast %14 : vector<1x128xf32> to vector<16x128xf32>
      %17 = arith.addf %15, %16 : vector<16x128xf32>
      %c0_10 = arith.constant 0 : index
      %c0_11 = arith.constant 0 : index
      %18 = vector.load %arg8[%c0_10, %c0_11] : memref<16x128xf32, #tpu.memory_space<vmem>>, vector<16x128xf32>
      tpu.vector_store %arg8[%c0_10, %c0_11], %17 {strides = array<i32>} : memref<16x128xf32, #tpu.memory_space<vmem>>, vector<16x128xf32>,
    } else {
    }
    return
  }
  func.func @transform_0(%arg0: i32, %arg1: i32, %arg2: i32) -> (i32, i32) {
    %c0_i32 = arith.constant 0 : i32
    return %arg0, %arg2 : i32, i32
  }
  func.func @transform_1(%arg0: i32, %arg1: i32, %arg2: i32) -> (i32, i32) {
    %c1_i32 = arith.constant 1 : i32
    %0 = arith.cmpi slt, %arg1, %c1_i32 : i32
    %c0_i32 = arith.constant 0 : i32
    %1 = arith.select %0, %arg1, %c0_i32 : i32
    %c0_i32_0 = arith.constant 0 : i32
    %2 = arith.select %0, %arg2, %c0_i32_0 : i32
    %c0_i32_1 = arith.constant 0 : i32
    return %1, %2 : i32, i32
  }
  func.func @transform_2(%arg0: i32, %arg1: i32, %arg2: i32) -> (i32, i32) {
    %c1_i32 = arith.constant 1 : i32
    %0 = arith.cmpi sge, %arg1, %c1_i32 : i32
    %c1_i32_0 = arith.constant 1 : i32
    %1 = arith.subi %arg1, %c1_i32_0 : i32
    %c0_i32 = arith.constant 0 : i32
    %2 = arith.select %0, %1, %c0_i32 : i32
    %c0_i32_1 = arith.constant 0 : i32
    %3 = arith.select %0, %arg2, %c0_i32_1 : i32
    %c0_i32_2 = arith.constant 0 : i32
    return %2, %3 : i32, i32
  }
  func.func @transform_3(%arg0: i32, %arg1: i32, %arg2: i32) -> (i32, i32) {
    %c1_i32 = arith.constant 1 : i32
    %0 = arith.cmpi slt, %arg1, %c1_i32 : i32
    %c0_i32 = arith.constant 0 : i32
    %1 = arith.select %0, %arg1, %c0_i32 : i32
    %c0_i32_0 = arith.constant 0 : i32
    %c0_i32_1 = arith.constant 0 : i32
    return %c0_i32_0, %1 : i32, i32
  }
  func.func @transform_4(%arg0: i32, %arg1: i32, %arg2: i32) -> (i32, i32) {
    %c1_i32 = arith.constant 1 : i32
    %0 = arith.cmpi sge, %arg1, %c1_i32 : i32
    %c1_i32_0 = arith.constant 1 : i32
    %1 = arith.subi %arg1, %c1_i32_0 : i32
    %c0_i32 = arith.constant 0 : i32
    %2 = arith.select %0, %1, %c0_i32 : i32
    %c0_i32_1 = arith.constant 0 : i32
    %c0_i32_2 = arith.constant 0 : i32
    return %c0_i32_1, %2 : i32, i32
  }
  func.func @transform_5(%arg0: i32, %arg1: i32, %arg2: i32) -> (i32, i32) {
    %c0_i32 = arith.constant 0 : i32
    return %arg0, %arg1 : i32, i32
  }
}

</mosaic_0001>

<llo_original>
// kernel: tpu_custom_call.1
$region0: #{tpu_custom_call.1}
  #allocation0 [shape = 'u32[]', space=smem, size = 0x4, offset = 0x4, fixed_abs, tag = 'smem constant byte address 0x4 - core index']
  #allocation1 [shape = 'u32[144,128]{1,0:T(1,128)}', space=vmem, size = 0x12000, scoped, tag = 'internal scratch']
  #allocation2 [shape = 'f32[16,128]{1,0:T(8,128)}', space=vmem, size = 0x2000, scoped, tag = 'scratch operand']
  %s0 = inlined_call_operand.vmem [shape: f32[16,32], index: 0, kind: input, shape index: {}]
  %s1 = inlined_call_operand.vmem [shape: f32[128,32], index: 1, kind: input, shape index: {}]
  %s2 = inlined_call_operand.vmem [shape: f32[128,32], index: 2, kind: input, shape index: {}]
  %s3 = inlined_call_operand.vmem [shape: f32[1,128], index: 3, kind: input, shape index: {}]
  %s4 = inlined_call_operand.vmem [shape: f32[1,128], index: 4, kind: input, shape index: {}]
  %s5 = inlined_call_operand.hbm [shape: f32[16,256], index: 5, kind: output, shape index: {}]
  %s6 = sld [smem:[#allocation0]]
  $region69: #{tpu_custom_call.1} parent=0
    _
  %s8 = ssub.s32 1, %s6
  %s9 = scalar_select 0, %s8, %s6
  $region1: #{tpu_custom_call.1} parent=0
    #allocation3 [shape = 'u8[16384]{0}', space=vmem, size = 0x4000, scoped, tag = 'output window, operand 0']
    #allocation4 [shape = 's32[2]{0}', space=sflag, size = 0x8, scoped, tag = 'scoped memory for tpu_custom_call.1']
    %10 = vsyncpa [#allocation4], 0
    %s11 = scalar_lea.sflag [#allocation4], 1
    %12 = vsyncpa %s11, 0
    loop: start=0, step=1, limit=4
    $region2: #{tpu_custom_call.1} parent=1 // loop_pre_header
      _
    $region3: #{tpu_custom_call.1} parent=1 // loop_header
      %s14 = sphi 0, %s18
      %p15 = scmp.ge.s32.totalorder %s14, 4
      %s21 = sphi 0, %s40
      %s22 = sphi 0, %s36
      %s23 = sphi 0, %s32
      %s24 = sphi 0, %s21
      %s25 = sphi 0, %s22
      %s26 = sphi 0, %s23
      %s27 = sphi 0, %s24
      %s28 = sphi 0, %s25
      %s29 = sphi 0, %s26
      %s45 = sphi 0, %s47
      %s48 = sphi 0, %s45
      %s49 = sphi 0, %s48
      %s65 = sphi 0, %s49
      %s79 = sphi 0, %s81
      %s82 = sphi 0, %s79
      %s83 = sphi 0, %s82
      %s99 = sphi 0, %s83
      %s115 = sphi 0, %s117
      %s118 = sphi 0, %s115
      %s119 = sphi 0, %s118
      %s135 = sphi 0, %s119
      %s145 = sphi 0, %s147
      %s148 = sphi 0, %s145
      %s149 = sphi 0, %s148
      %s165 = sphi 0, %s149
      %s177 = sphi 0, %s179
      %s180 = sphi 0, %s177
      %s181 = sphi 0, %s180
      %s197 = sphi 0, %s181
      %s205 = sphi 0, %s207
      %s208 = sphi 0, %s205
      %s209 = sphi 0, %s208
      %s225 = sphi 0, %s209
    $region4: #{tpu_custom_call.1} parent=1 // loop_header_branch
      %17 = sbr.rel (%p15) target = $region8
    $region5: #{tpu_custom_call.1} parent=1 // loop_body
      %s19 = ssub.s32 %s14, 1
      %s20 = ssub.s32 %s14, 2
      %s30 = sadd.s32 1, %s23
      %p31 = scmp.ge.s32.totalorder %s30, 1
      %s32 = scalar_select %p31, 0, %s30
      %s33 = sadd.s32 1, %s22
      %s34 = scalar_select %p31, %s33, %s22
      %p35 = scmp.ge.s32.totalorder %s34, 2
      %s36 = scalar_select %p35, 0, %s34
      %s37 = sadd.s32 1, %s21
      %s38 = scalar_select %p35, %s37, %s21
      %p39 = scmp.ge.s32.totalorder %s38, 1
      %s40 = scalar_select %p39, 0, %s38
      %s41 = ssub.s32 %s21, %s40
      %s42 = ssub.s32 %s23, %s32
      %s43 = sor.u32 %s41, %s42
      %p44 = scmp.eq.s32.totalorder %s43, 0
      %s46 = sadd.s32 %s45, 1
      %s47 = scalar_select %p44, %s45, %s46
      %p50 = pneg %p44
      %p51 = scmp.eq.s32.totalorder %s14, 1
      %p52 = por %p50, %p51
      %p53 = scmp.ne.s32.totalorder %s45, %s48
      %p54 = scmp.eq.s32.totalorder %s14, 0
      %p55 = por %p53, %p54
      %p56 = scmp.ne.s32.totalorder %s45, %s48
      %p57 = scmp.eq.s32.totalorder %s19, 1
      %p58 = por %p56, %p57
      %p59 = scmp.ne.s32.totalorder %s48, %s49
      %p60 = scmp.eq.s32.totalorder %s19, 0
      %p61 = por %p59, %p60
      %p62 = scmp.ne.s32.totalorder %s48, %s49
      %p63 = scmp.eq.s32.totalorder %s20, 1
      %p64 = por %p62, %p63
      %p66 = scmp.ne.s32.totalorder %s49, %s65
      %p67 = scmp.eq.s32.totalorder %s20, 0
      %p68 = por %p66, %p67
      %p69 = scmp.lt.s32.totalorder %s22, 1
      %s70 = scalar_select %p69, %s22, 0
      %s71 = scalar_select %p69, %s23, 0
      %p72 = scmp.lt.s32.totalorder %s36, 1
      %s73 = scalar_select %p72, %s36, 0
      %s74 = scalar_select %p72, %s32, 0
      %s75 = ssub.s32 %s70, %s73
      %s76 = ssub.s32 %s71, %s74
      %s77 = sor.u32 %s75, %s76
      %p78 = scmp.eq.s32.totalorder %s77, 0
      %s80 = sadd.s32 %s79, 1
      %s81 = scalar_select %p78, %s79, %s80
      %p84 = pneg %p78
      %p85 = scmp.eq.s32.totalorder %s14, 1
      %p86 = por %p84, %p85
      %p87 = scmp.ne.s32.totalorder %s79, %s82
      %p88 = scmp.eq.s32.totalorder %s14, 0
      %p89 = por %p87, %p88
      %p90 = scmp.ne.s32.totalorder %s79, %s82
      %p91 = scmp.eq.s32.totalorder %s19, 1
      %p92 = por %p90, %p91
      %p93 = scmp.ne.s32.totalorder %s82, %s83
      %p94 = scmp.eq.s32.totalorder %s19, 0
      %p95 = por %p93, %p94
      %p96 = scmp.ne.s32.totalorder %s82, %s83
      %p97 = scmp.eq.s32.totalorder %s20, 1
      %p98 = por %p96, %p97
      %p100 = scmp.ne.s32.totalorder %s83, %s99
      %p101 = scmp.eq.s32.totalorder %s20, 0
      %p102 = por %p100, %p101
      %p103 = scmp.ge.s32.totalorder %s22, 1
      %s104 = ssub.s32 %s22, 1
      %s105 = scalar_select %p103, %s104, 0
      %s106 = scalar_select %p103, %s23, 0
      %p107 = scmp.ge.s32.totalorder %s36, 1
      %s108 = ssub.s32 %s36, 1
      %s109 = scalar_select %p107, %s108, 0
      %s110 = scalar_select %p107, %s32, 0
      %s111 = ssub.s32 %s105, %s109
      %s112 = ssub.s32 %s106, %s110
      %s113 = sor.u32 %s111, %s112
      %p114 = scmp.eq.s32.totalorder %s113, 0
      %s116 = sadd.s32 %s115, 1
      %s117 = scalar_select %p114, %s115, %s116
      %p120 = pneg %p114
      %p121 = scmp.eq.s32.totalorder %s14, 1
      %p122 = por %p120, %p121
      %p123 = scmp.ne.s32.totalorder %s115, %s118
      %p124 = scmp.eq.s32.totalorder %s14, 0
      %p125 = por %p123, %p124
      %p126 = scmp.ne.s32.totalorder %s115, %s118
      %p127 = scmp.eq.s32.totalorder %s19, 1
      %p128 = por %p126, %p127
      %p129 = scmp.ne.s32.totalorder %s118, %s119
      %p130 = scmp.eq.s32.totalorder %s19, 0
      %p131 = por %p129, %p130
      %p132 = scmp.ne.s32.totalorder %s118, %s119
      %p133 = scmp.eq.s32.totalorder %s20, 1
      %p134 = por %p132, %p133
      %p136 = scmp.ne.s32.totalorder %s119, %s135
      %p137 = scmp.eq.s32.totalorder %s20, 0
      %p138 = por %p136, %p137
      %p139 = scmp.lt.s32.totalorder %s22, 1
      %s140 = scalar_select %p139, %s22, 0
      %p141 = scmp.lt.s32.totalorder %s36, 1
      %s142 = scalar_select %p141, %s36, 0
      %s143 = ssub.s32 %s140, %s142
      %p144 = scmp.eq.s32.totalorder %s143, 0
      %s146 = sadd.s32 %s145, 1
      %s147 = scalar_select %p144, %s145, %s146
      %p150 = pneg %p144
      %p151 = scmp.eq.s32.totalorder %s14, 1
      %p152 = por %p150, %p151
      %p153 = scmp.ne.s32.totalorder %s145, %s148
      %p154 = scmp.eq.s32.totalorder %s14, 0
      %p155 = por %p153, %p154
      %p156 = scmp.ne.s32.totalorder %s145, %s148
      %p157 = scmp.eq.s32.totalorder %s19, 1
      %p158 = por %p156, %p157
      %p159 = scmp.ne.s32.totalorder %s148, %s149
      %p160 = scmp.eq.s32.totalorder %s19, 0
      %p161 = por %p159, %p160
      %p162 = scmp.ne.s32.totalorder %s148, %s149
      %p163 = scmp.eq.s32.totalorder %s20, 1
      %p164 = por %p162, %p163
      %p166 = scmp.ne.s32.totalorder %s149, %s165
      %p167 = scmp.eq.s32.totalorder %s20, 0
      %p168 = por %p166, %p167
      %p169 = scmp.ge.s32.totalorder %s22, 1
      %s170 = ssub.s32 %s22, 1
      %s171 = scalar_select %p169, %s170, 0
      %p172 = scmp.ge.s32.totalorder %s36, 1
      %s173 = ssub.s32 %s36, 1
      %s174 = scalar_select %p172, %s173, 0
      %s175 = ssub.s32 %s171, %s174
      %p176 = scmp.eq.s32.totalorder %s175, 0
      %s178 = sadd.s32 %s177, 1
      %s179 = scalar_select %p176, %s177, %s178
      %p182 = pneg %p176
      %p183 = scmp.eq.s32.totalorder %s14, 1
      %p184 = por %p182, %p183
      %p185 = scmp.ne.s32.totalorder %s177, %s180
      %p186 = scmp.eq.s32.totalorder %s14, 0
      %p187 = por %p185, %p186
      %p188 = scmp.ne.s32.totalorder %s177, %s180
      %p189 = scmp.eq.s32.totalorder %s19, 1
      %p190 = por %p188, %p189
      %p191 = scmp.ne.s32.totalorder %s180, %s181
      %p192 = scmp.eq.s32.totalorder %s19, 0
      %p193 = por %p191, %p192
      %p194 = scmp.ne.s32.totalorder %s180, %s181
      %p195 = scmp.eq.s32.totalorder %s20, 1
      %p196 = por %p194, %p195
      %p198 = scmp.ne.s32.totalorder %s181, %s197
      %p199 = scmp.eq.s32.totalorder %s20, 0
      %p200 = por %p198, %p199
      %s201 = ssub.s32 %s21, %s40
      %s202 = ssub.s32 %s22, %s36
      %s203 = sor.u32 %s201, %s202
      %p204 = scmp.eq.s32.totalorder %s203, 0
      %s206 = sadd.s32 %s205, 1
      %s207 = scalar_select %p204, %s205, %s206
      %p210 = pneg %p204
      %p211 = scmp.eq.s32.totalorder %s14, 1
      %p212 = por %p210, %p211
      %p213 = scmp.ne.s32.totalorder %s205, %s208
      %p214 = scmp.eq.s32.totalorder %s14, 0
      %p215 = por %p213, %p214
      %p216 = scmp.ne.s32.totalorder %s205, %s208
      %p217 = scmp.eq.s32.totalorder %s19, 1
      %p218 = por %p216, %p217
      %p219 = scmp.ne.s32.totalorder %s208, %s209
      %p220 = scmp.eq.s32.totalorder %s19, 0
      %p221 = por %p219, %p220
      %p222 = scmp.ne.s32.totalorder %s208, %s209
      %p223 = scmp.eq.s32.totalorder %s20, 1
      %p224 = por %p222, %p223
      %p226 = scmp.ne.s32.totalorder %s209, %s225
      %p227 = scmp.eq.s32.totalorder %s20, 0
      %p228 = por %p226, %p227
      %p229 = scmp.le.s32.totalorder 1, %s14
      %p230 = scmp.lt.s32.totalorder %s14, 3
      %p231 = pnand %p229, %p230
      %p232 = pneg %p231
      // Predicated region
      $region9: #{tpu_custom_call.1} parent=5 // pred_check
        _
      $region10: #{tpu_custom_call.1} parent=5 // pred_check_branch
        %234 = sbr.rel (%p231) target = $region12
      $region11: #{tpu_custom_call.1} parent=5 // pred_region
        %s235 = ssub.s32 %s14, 1
        // Predicated region
        $region13: #{tpu_custom_call.1} parent=11 // pred_check
          %p236 = pneg %p61
        $region14: #{tpu_custom_call.1} parent=11 // pred_check_branch
          %238 = sbr.rel (%p236) target = $region16
        $region15: #{tpu_custom_call.1} parent=11 // pred_region
          %s239 = smul.u32 2, %s24
          %p240 = scmp.lt.s32.totalorder %s239, 1
          %s241 = scalar_select %p240, %s239, 1
          %p242 = scmp.lt.s32.totalorder %s26, 0
          %s243 = scalar_select %p242, %s26, 0
          %s244 = sadd.s32 %s243, %s241
          %s245 = smul.addr %s244, 8
          %s246 = scalar_lea.vmem %s0, %s245
          %s247 = smul.u32 2, %s24
        $region16: #{tpu_custom_call.1} parent=11 // pred_fallthru
          _
      $region12: #{tpu_custom_call.1} parent=5 // pred_fallthru
        _
      %p248 = scmp.lt.s32.totalorder %s14, 2
      // Predicated region
      $region17: #{tpu_custom_call.1} parent=5 // pred_check
        %p249 = pneg %p248
      $region18: #{tpu_custom_call.1} parent=5 // pred_check_branch
        %251 = sbr.rel (%p249) target = $region20
      $region19: #{tpu_custom_call.1} parent=5 // pred_region
        // Predicated region
        $region21: #{tpu_custom_call.1} parent=19 // pred_check
          %p252 = pneg %p89
        $region22: #{tpu_custom_call.1} parent=19 // pred_check_branch
          %254 = sbr.rel (%p252) target = $region24
        $region23: #{tpu_custom_call.1} parent=19 // pred_region
          %p255 = scmp.lt.s32.totalorder %s22, 1
          %s256 = scalar_select %p255, %s22, 0
          %s257 = scalar_select %p255, %s23, 0
          %s258 = smul.u32 16, %s256
          %p259 = scmp.lt.s32.totalorder %s258, 15
          %s260 = scalar_select %p259, %s258, 15
          %p261 = scmp.lt.s32.totalorder %s257, 0
          %s262 = scalar_select %p261, %s257, 0
          %s263 = sadd.s32 %s262, %s260
          %s264 = smul.addr %s263, 8
          %s265 = scalar_lea.vmem %s1, %s264
          %p266 = scmp.lt.s32.totalorder %s22, 1
          %s267 = scalar_select %p266, %s22, 0
          %s268 = scalar_select %p266, %s23, 0
          %s269 = smul.u32 16, %s267
        $region24: #{tpu_custom_call.1} parent=19 // pred_fallthru
          _
        // Predicated region
        $region25: #{tpu_custom_call.1} parent=19 // pred_check
          %p270 = pneg %p125
        $region26: #{tpu_custom_call.1} parent=19 // pred_check_branch
          %272 = sbr.rel (%p270) target = $region28
        $region27: #{tpu_custom_call.1} parent=19 // pred_region
          %p273 = scmp.ge.s32.totalorder %s22, 1
          %s274 = ssub.s32 %s22, 1
          %s275 = scalar_select %p273, %s274, 0
          %s276 = scalar_select %p273, %s23, 0
          %s277 = smul.u32 16, %s275
          %p278 = scmp.lt.s32.totalorder %s277, 15
          %s279 = scalar_select %p278, %s277, 15
          %p280 = scmp.lt.s32.totalorder %s276, 0
          %s281 = scalar_select %p280, %s276, 0
          %s282 = sadd.s32 %s281, %s279
          %s283 = smul.addr %s282, 8
          %s284 = scalar_lea.vmem %s2, %s283
          %p285 = scmp.ge.s32.totalorder %s22, 1
          %s286 = ssub.s32 %s22, 1
          %s287 = scalar_select %p285, %s286, 0
          %s288 = scalar_select %p285, %s23, 0
          %s289 = smul.u32 16, %s287
        $region28: #{tpu_custom_call.1} parent=19 // pred_fallthru
          _
        // Predicated region
        $region29: #{tpu_custom_call.1} parent=19 // pred_check
          %p290 = pneg %p155
        $region30: #{tpu_custom_call.1} parent=19 // pred_check_branch
          %292 = sbr.rel (%p290) target = $region32
        $region31: #{tpu_custom_call.1} parent=19 // pred_region
          %p293 = scmp.lt.s32.totalorder %s22, 1
          %s294 = scalar_select %p293, %s22, 0
          %p295 = scmp.lt.s32.totalorder %s294, 0
          %s296 = scalar_select %p295, %s294, 0
          %s297 = scalar_lea.vmem %s3, %s296
          %p298 = scmp.lt.s32.totalorder %s22, 1
          %s299 = scalar_select %p298, %s22, 0
        $region32: #{tpu_custom_call.1} parent=19 // pred_fallthru
          _
        // Predicated region
        $region33: #{tpu_custom_call.1} parent=19 // pred_check
          %p300 = pneg %p187
        $region34: #{tpu_custom_call.1} parent=19 // pred_check_branch
          %302 = sbr.rel (%p300) target = $region36
        $region35: #{tpu_custom_call.1} parent=19 // pred_region
          %p303 = scmp.ge.s32.totalorder %s22, 1
          %s304 = ssub.s32 %s22, 1
          %s305 = scalar_select %p303, %s304, 0
          %p306 = scmp.lt.s32.totalorder %s305, 0
          %s307 = scalar_select %p306, %s305, 0
          %s308 = scalar_lea.vmem %s4, %s307
          %p309 = scmp.ge.s32.totalorder %s22, 1
          %s310 = ssub.s32 %s22, 1
          %s311 = scalar_select %p309, %s310, 0
        $region36: #{tpu_custom_call.1} parent=19 // pred_fallthru
          _
      $region20: #{tpu_custom_call.1} parent=5 // pred_fallthru
        _
      %p312 = scmp.le.s32.totalorder 1, %s14
      %p313 = scmp.lt.s32.totalorder %s14, 3
      %p314 = pnand %p312, %p313
      %p315 = pneg %p314
      // Predicated region
      $region37: #{tpu_custom_call.1} parent=5 // pred_check
        _
      $region38: #{tpu_custom_call.1} parent=5 // pred_check_branch
        %317 = sbr.rel (%p314) target = $region40
      $region39: #{tpu_custom_call.1} parent=5 // pred_region
        %s318 = ssub.s32 %s14, 1
        %s319 = smul.u32 2, %s24
        %p320 = scmp.lt.s32.totalorder %s319, 1
        %s321 = scalar_select %p320, %s319, 1
        %p322 = scmp.lt.s32.totalorder %s26, 0
        %s323 = scalar_select %p322, %s26, 0
        %s324 = sadd.s32 %s323, %s321
        %s325 = smul.addr %s324, 8
        %s326 = scalar_lea.vmem %s0, %s325
        %p327 = pneg %p61
        %p328 = pneg %p58
        %p329 = scmp.lt.s32.totalorder %s25, 1
        %s330 = scalar_select %p329, %s25, 0
        %s331 = scalar_select %p329, %s26, 0
        %s332 = smul.u32 16, %s330
        %p333 = scmp.lt.s32.totalorder %s332, 15
        %s334 = scalar_select %p333, %s332, 15
        %p335 = scmp.lt.s32.totalorder %s331, 0
        %s336 = scalar_select %p335, %s331, 0
        %s337 = sadd.s32 %s336, %s334
        %s338 = smul.addr %s337, 8
        %s339 = scalar_lea.vmem %s1, %s338
        %p340 = pneg %p95
        %p341 = pneg %p92
        %p342 = scmp.ge.s32.totalorder %s25, 1
        %s343 = ssub.s32 %s25, 1
        %s344 = scalar_select %p342, %s343, 0
        %s345 = scalar_select %p342, %s26, 0
        %s346 = smul.u32 16, %s344
        %p347 = scmp.lt.s32.totalorder %s346, 15
        %s348 = scalar_select %p347, %s346, 15
        %p349 = scmp.lt.s32.totalorder %s345, 0
        %s350 = scalar_select %p349, %s345, 0
        %s351 = sadd.s32 %s350, %s348
        %s352 = smul.addr %s351, 8
        %s353 = scalar_lea.vmem %s2, %s352
        %p354 = pneg %p131
        %p355 = pneg %p128
        %p356 = scmp.lt.s32.totalorder %s25, 1
        %s357 = scalar_select %p356, %s25, 0
        %p358 = scmp.lt.s32.totalorder %s357, 0
        %s359 = scalar_select %p358, %s357, 0
        %s360 = scalar_lea.vmem %s3, %s359
        %p361 = pneg %p161
        %p362 = pneg %p158
        %p363 = scmp.ge.s32.totalorder %s25, 1
        %s364 = ssub.s32 %s25, 1
        %s365 = scalar_select %p363, %s364, 0
        %p366 = scmp.lt.s32.totalorder %s365, 0
        %s367 = scalar_select %p366, %s365, 0
        %s368 = scalar_lea.vmem %s4, %s367
        %p369 = pneg %p193
        %p370 = pneg %p190
        %p371 = pneg %p221
        %p372 = pneg %p218
        %s373 = sand.u32 %s208, 1
        %s374 = scalar_lea.sflag [#allocation4], %s373
        %s375 = sand.u32 %s208, 1
        %s376 = smul.addr %s375, 16
        %s377 = scalar_lea.vmem [#allocation3], %s376
        %s378 = smul.u32 2, %s24
        %p379 = scmp.lt.s32.totalorder %s378, 1
        %s380 = scalar_select %p379, %s378, 1
        %p381 = scmp.lt.s32.totalorder %s26, 0
        %s382 = scalar_select %p381, %s26, 0
        %s383 = sadd.s32 %s382, %s380
        %s384 = smul.addr %s383, 8
        %s385 = scalar_lea.vmem %s0, %s384
        %s386 = smul.u32 2, %s24
        %p387 = scmp.lt.s32.totalorder %s25, 1
        %s388 = scalar_select %p387, %s25, 0
        %s389 = scalar_select %p387, %s26, 0
        %s390 = smul.u32 16, %s388
        %p391 = scmp.lt.s32.totalorder %s390, 15
        %s392 = scalar_select %p391, %s390, 15
        %p393 = scmp.lt.s32.totalorder %s389, 0
        %s394 = scalar_select %p393, %s389, 0
        %s395 = sadd.s32 %s394, %s392
        %s396 = smul.addr %s395, 8
        %s397 = scalar_lea.vmem %s1, %s396
        %p398 = scmp.lt.s32.totalorder %s25, 1
        %s399 = scalar_select %p398, %s25, 0
        %s400 = scalar_select %p398, %s26, 0
        %s401 = smul.u32 16, %s399
        %p402 = scmp.ge.s32.totalorder %s25, 1
        %s403 = ssub.s32 %s25, 1
        %s404 = scalar_select %p402, %s403, 0
        %s405 = scalar_select %p402, %s26, 0
        %s406 = smul.u32 16, %s404
        %p407 = scmp.lt.s32.totalorder %s406, 15
        %s408 = scalar_select %p407, %s406, 15
        %p409 = scmp.lt.s32.totalorder %s405, 0
        %s410 = scalar_select %p409, %s405, 0
        %s411 = sadd.s32 %s410, %s408
        %s412 = smul.addr %s411, 8
        %s413 = scalar_lea.vmem %s2, %s412
        %p414 = scmp.ge.s32.totalorder %s25, 1
        %s415 = ssub.s32 %s25, 1
        %s416 = scalar_select %p414, %s415, 0
        %s417 = scalar_select %p414, %s26, 0
        %s418 = smul.u32 16, %s416
        %p419 = scmp.lt.s32.totalorder %s25, 1
        %s420 = scalar_select %p419, %s25, 0
        %p421 = scmp.lt.s32.totalorder %s420, 0
        %s422 = scalar_select %p421, %s420, 0
        %s423 = scalar_lea.vmem %s3, %s422
        %p424 = scmp.lt.s32.totalorder %s25, 1
        %s425 = scalar_select %p424, %s25, 0
        %p426 = scmp.ge.s32.totalorder %s25, 1
        %s427 = ssub.s32 %s25, 1
        %s428 = scalar_select %p426, %s427, 0
        %p429 = scmp.lt.s32.totalorder %s428, 0
        %s430 = scalar_select %p429, %s428, 0
        %s431 = scalar_lea.vmem %s4, %s430
        %p432 = scmp.ge.s32.totalorder %s25, 1
        %s433 = ssub.s32 %s25, 1
        %s434 = scalar_select %p432, %s433, 0
        %s435 = smul.u32 2, %s24
        %p436 = scmp.lt.s32.totalorder %s25, 1
        %p437 = scmp.eq.s32.totalorder %s26, 0
        // Predicated region
        $region41: #{tpu_custom_call.1} parent=39 // pred_check
          %p438 = pneg %p437
        $region42: #{tpu_custom_call.1} parent=39 // pred_check_branch
          %440 = sbr.rel (%p438) target = $region44
        $region43: #{tpu_custom_call.1} parent=39 // pred_region
          %441 = vst [vmem:[#allocation2] sm:$0xff] 0.0
          %442 = vst [vmem:[#allocation2 + $0x8] sm:$0xff] 0.0
        $region44: #{tpu_custom_call.1} parent=39 // pred_fallthru
          _
        // Predicated region
        $region45: #{tpu_custom_call.1} parent=39 // pred_check
          %p443 = pneg %p436
        $region46: #{tpu_custom_call.1} parent=39 // pred_check_branch
          %445 = sbr.rel (%p443) target = $region48
        $region47: #{tpu_custom_call.1} parent=39 // pred_region
          %v446 = vld [vmem:[#allocation2] sm:$0xff]
          %v447 = vld [vmem:[#allocation2 + $0x8] sm:$0xff]
          %v448 = vld [vmem:[%s385] sm:$0xff]
          %v449 = vld [vmem:[%s385 + $0x8] sm:$0xff]
          %v450 = vld [vmem:[%s397] sm:$0xff]
          %v451 = vld [vmem:[%s397 + $0x8] sm:$0xff]
          %v452 = vld [vmem:[%s397 + $0x10] sm:$0xff]
          %v453 = vld [vmem:[%s397 + $0x18] sm:$0xff]
          %v454 = vld [vmem:[%s397 + $0x20] sm:$0xff]
          %v455 = vld [vmem:[%s397 + $0x28] sm:$0xff]
          %v456 = vld [vmem:[%s397 + $0x30] sm:$0xff]
          %v457 = vld [vmem:[%s397 + $0x38] sm:$0xff]
          %v458 = vld [vmem:[%s397 + $0x40] sm:$0xff]
          %v459 = vld [vmem:[%s397 + $0x48] sm:$0xff]
          %v460 = vld [vmem:[%s397 + $0x50] sm:$0xff]
          %v461 = vld [vmem:[%s397 + $0x58] sm:$0xff]
          %v462 = vld [vmem:[%s397 + $0x60] sm:$0xff]
          %v463 = vld [vmem:[%s397 + $0x68] sm:$0xff]
          %v464 = vld [vmem:[%s397 + $0x70] sm:$0xff]
          %v465 = vld [vmem:[%s397 + $0x78] sm:$0xff]
          %vm466 = vcmask 261120
          %v468 = vsel %vm466, %v448, 0
          %v471 = vsel %vm466, %v449, 0
          %v474 = vsel %vm466, %v450, 0
          %v477 = vsel %vm466, %v451, 0
          %v480 = vsel %vm466, %v452, 0
          %v483 = vsel %vm466, %v453, 0
          %v486 = vsel %vm466, %v454, 0
          %v489 = vsel %vm466, %v455, 0
          %v492 = vsel %vm466, %v456, 0
          %v495 = vsel %vm466, %v457, 0
          %v498 = vsel %vm466, %v458, 0
          %v501 = vsel %vm466, %v459, 0
          %v504 = vsel %vm466, %v460, 0
          %v507 = vsel %vm466, %v461, 0
          %v510 = vsel %vm466, %v462, 0
          %v513 = vsel %vm466, %v463, 0
          %v516 = vsel %vm466, %v464, 0
          %v519 = vsel %vm466, %v465, 0
          %521 = vmatprep.subr.mxu0 0.0
          %522 = vmatpush1.xpose.msra.mxu0 %v519
          %523 = vmatprep.subr.mxu0 0.0
          %524 = vmatpush1.xpose.msra.mxu0 %v516
          %525 = vmatprep.subr.mxu0 0.0
          %526 = vmatpush1.xpose.msra.mxu0 %v513
          %527 = vmatprep.subr.mxu0 0.0
          %528 = vmatpush1.xpose.msra.mxu0 %v510
          %529 = vmatprep.subr.mxu0 0.0
          %530 = vmatpush1.xpose.msra.mxu0 %v507
          %531 = vmatprep.subr.mxu0 0.0
          %532 = vmatpush1.xpose.msra.mxu0 %v504
          %533 = vmatprep.subr.mxu0 0.0
          %534 = vmatpush1.xpose.msra.mxu0 %v501
          %535 = vmatprep.subr.mxu0 0.0
          %536 = vmatpush1.xpose.msra.mxu0 %v498
          %537 = vmatprep.subr.mxu0 0.0
          %538 = vmatpush1.xpose.msra.mxu0 %v495
          %539 = vmatprep.subr.mxu0 0.0
          %540 = vmatpush1.xpose.msra.mxu0 %v492
          %541 = vmatprep.subr.mxu0 0.0
          %542 = vmatpush1.xpose.msra.mxu0 %v489
          %543 = vmatprep.subr.mxu0 0.0
          %544 = vmatpush1.xpose.msra.mxu0 %v486
          %545 = vmatprep.subr.mxu0 0.0
          %546 = vmatpush1.xpose.msra.mxu0 %v483
          %547 = vmatprep.subr.mxu0 0.0
          %548 = vmatpush1.xpose.msra.mxu0 %v480
          %549 = vmatprep.subr.mxu0 0.0
          %550 = vmatpush1.xpose.msra.mxu0 %v477
          %551 = vmatprep.subr.mxu0 0.0
          %552 = vmatpush1.xpose.msra.mxu0 %v474
          %553 = vmatprep.subr.mxu0 0.0
          %554 = vmatpush2.xpose.msra.mxu0 0.0
          %555 = vmatprep.subr.mxu0 0.0
          %556 = vmatpush2.xpose.msra.mxu0 0.0
          %557 = vmatprep.subr.mxu0 0.0
          %558 = vmatpush2.xpose.msra.mxu0 0.0
          %559 = vmatprep.subr.mxu0 0.0
          %560 = vmatpush2.xpose.msra.mxu0 0.0
          %561 = vmatprep.subr.mxu0 0.0
          %562 = vmatpush2.xpose.msra.mxu0 0.0
          %563 = vmatprep.subr.mxu0 0.0
          %564 = vmatpush2.xpose.msra.mxu0 0.0
          %565 = vmatprep.subr.mxu0 0.0
          %566 = vmatpush2.xpose.msra.mxu0 0.0
          %567 = vmatprep.subr.mxu0 0.0
          %568 = vmatpush2.xpose.msra.mxu0 0.0
          %569 = vmatprep.subr.mxu0 0.0
          %570 = vmatpush2.xpose.msra.mxu0 0.0
          %571 = vmatprep.subr.mxu0 0.0
          %572 = vmatpush2.xpose.msra.mxu0 0.0
          %573 = vmatprep.subr.mxu0 0.0
          %574 = vmatpush2.xpose.msra.mxu0 0.0
          %575 = vmatprep.subr.mxu0 0.0
          %576 = vmatpush2.xpose.msra.mxu0 0.0
          %577 = vmatprep.subr.mxu0 0.0
          %578 = vmatpush2.xpose.msra.mxu0 0.0
          %579 = vmatprep.subr.mxu0 0.0
          %580 = vmatpush2.xpose.msra.mxu0 0.0
          %581 = vmatprep.subr.mxu0 0.0
          %582 = vmatpush2.xpose.msra.mxu0 0.0
          %583 = vmatprep.subr.mxu0 0.0
          %584 = vmatpush2.xpose.msra.mxu0 0.0
          %585 = vmatprep.mubr.f32.mxu0 0.0
          %586 = vmatmul.mubr.f32.gmra.mxu0 %v468
          %v587 = vpop.f32.mrf.mxu0
          %v588 = vadd.f32 0.0, %v587
          %v589 = vpop.f32.mrf.mxu0
          %590 = vmatprep.mubr.f32.mxu0 0.0
          %591 = vmatmul.mubr.f32.gmra.mxu0 %v471
          %v592 = vpop.f32.mrf.mxu0
          %v593 = vadd.f32 0.0, %v592
          %v594 = vpop.f32.mrf.mxu0
          %595 = vdwg.mxu0
          %v596 = vadd.f32 %v446, %v588
          %v597 = vadd.f32 %v447, %v593
          %598 = vst [vmem:[#allocation2] sm:$0xff] %v596
          %599 = vst [vmem:[#allocation2 + $0x8] sm:$0xff] %v597
        $region48: #{tpu_custom_call.1} parent=39 // pred_fallthru
          _
        %p600 = scmp.ge.s32.totalorder %s25, 1
        // Predicated region
        $region49: #{tpu_custom_call.1} parent=39 // pred_check
          %p601 = pneg %p600
        $region50: #{tpu_custom_call.1} parent=39 // pred_check_branch
          %603 = sbr.rel (%p601) target = $region52
        $region51: #{tpu_custom_call.1} parent=39 // pred_region
          %v604 = vld [vmem:[#allocation2] sm:$0xff]
          %v605 = vld [vmem:[#allocation2 + $0x8] sm:$0xff]
          %v606 = vld [vmem:[%s385] sm:$0xff]
          %v607 = vld [vmem:[%s385 + $0x8] sm:$0xff]
          %v608 = vld [vmem:[%s413] sm:$0xff]
          %v609 = vld [vmem:[%s413 + $0x8] sm:$0xff]
          %v610 = vld [vmem:[%s413 + $0x10] sm:$0xff]
          %v611 = vld [vmem:[%s413 + $0x18] sm:$0xff]
          %v612 = vld [vmem:[%s413 + $0x20] sm:$0xff]
          %v613 = vld [vmem:[%s413 + $0x28] sm:$0xff]
          %v614 = vld [vmem:[%s413 + $0x30] sm:$0xff]
          %v615 = vld [vmem:[%s413 + $0x38] sm:$0xff]
          %v616 = vld [vmem:[%s413 + $0x40] sm:$0xff]
          %v617 = vld [vmem:[%s413 + $0x48] sm:$0xff]
          %v618 = vld [vmem:[%s413 + $0x50] sm:$0xff]
          %v619 = vld [vmem:[%s413 + $0x58] sm:$0xff]
          %v620 = vld [vmem:[%s413 + $0x60] sm:$0xff]
          %v621 = vld [vmem:[%s413 + $0x68] sm:$0xff]
          %v622 = vld [vmem:[%s413 + $0x70] sm:$0xff]
          %v623 = vld [vmem:[%s413 + $0x78] sm:$0xff]
          %vm624 = vcmask 261120
          %v626 = vsel %vm624, %v606, 0
          %v629 = vsel %vm624, %v607, 0
          %v632 = vsel %vm624, %v608, 0
          %v635 = vsel %vm624, %v609, 0
          %v638 = vsel %vm624, %v610, 0
          %v641 = vsel %vm624, %v611, 0
          %v644 = vsel %vm624, %v612, 0
          %v647 = vsel %vm624, %v613, 0
          %v650 = vsel %vm624, %v614, 0
          %v653 = vsel %vm624, %v615, 0
          %v656 = vsel %vm624, %v616, 0
          %v659 = vsel %vm624, %v617, 0
          %v662 = vsel %vm624, %v618, 0
          %v665 = vsel %vm624, %v619, 0
          %v668 = vsel %vm624, %v620, 0
          %v671 = vsel %vm624, %v621, 0
          %v674 = vsel %vm624, %v622, 0
          %v677 = vsel %vm624, %v623, 0
          %679 = vmatprep.subr.mxu0 0.0
          %680 = vmatpush1.xpose.msra.mxu0 %v677
          %681 = vmatprep.subr.mxu0 0.0
          %682 = vmatpush1.xpose.msra.mxu0 %v674
          %683 = vmatprep.subr.mxu0 0.0
          %684 = vmatpush1.xpose.msra.mxu0 %v671
          %685 = vmatprep.subr.mxu0 0.0
          %686 = vmatpush1.xpose.msra.mxu0 %v668
          %687 = vmatprep.subr.mxu0 0.0
          %688 = vmatpush1.xpose.msra.mxu0 %v665
          %689 = vmatprep.subr.mxu0 0.0
          %690 = vmatpush1.xpose.msra.mxu0 %v662
          %691 = vmatprep.subr.mxu0 0.0
          %692 = vmatpush1.xpose.msra.mxu0 %v659
          %693 = vmatprep.subr.mxu0 0.0
          %694 = vmatpush1.xpose.msra.mxu0 %v656
          %695 = vmatprep.subr.mxu0 0.0
          %696 = vmatpush1.xpose.msra.mxu0 %v653
          %697 = vmatprep.subr.mxu0 0.0
          %698 = vmatpush1.xpose.msra.mxu0 %v650
          %699 = vmatprep.subr.mxu0 0.0
          %700 = vmatpush1.xpose.msra.mxu0 %v647
          %701 = vmatprep.subr.mxu0 0.0
          %702 = vmatpush1.xpose.msra.mxu0 %v644
          %703 = vmatprep.subr.mxu0 0.0
          %704 = vmatpush1.xpose.msra.mxu0 %v641
          %705 = vmatprep.subr.mxu0 0.0
          %706 = vmatpush1.xpose.msra.mxu0 %v638
          %707 = vmatprep.subr.mxu0 0.0
          %708 = vmatpush1.xpose.msra.mxu0 %v635
          %709 = vmatprep.subr.mxu0 0.0
          %710 = vmatpush1.xpose.msra.mxu0 %v632
          %711 = vmatprep.subr.mxu0 0.0
          %712 = vmatpush2.xpose.msra.mxu0 0.0
          %713 = vmatprep.subr.mxu0 0.0
          %714 = vmatpush2.xpose.msra.mxu0 0.0
          %715 = vmatprep.subr.mxu0 0.0
          %716 = vmatpush2.xpose.msra.mxu0 0.0
          %717 = vmatprep.subr.mxu0 0.0
          %718 = vmatpush2.xpose.msra.mxu0 0.0
          %719 = vmatprep.subr.mxu0 0.0
          %720 = vmatpush2.xpose.msra.mxu0 0.0
          %721 = vmatprep.subr.mxu0 0.0
          %722 = vmatpush2.xpose.msra.mxu0 0.0
          %723 = vmatprep.subr.mxu0 0.0
          %724 = vmatpush2.xpose.msra.mxu0 0.0
          %725 = vmatprep.subr.mxu0 0.0
          %726 = vmatpush2.xpose.msra.mxu0 0.0
          %727 = vmatprep.subr.mxu0 0.0
          %728 = vmatpush2.xpose.msra.mxu0 0.0
          %729 = vmatprep.subr.mxu0 0.0
          %730 = vmatpush2.xpose.msra.mxu0 0.0
          %731 = vmatprep.subr.mxu0 0.0
          %732 = vmatpush2.xpose.msra.mxu0 0.0
          %733 = vmatprep.subr.mxu0 0.0
          %734 = vmatpush2.xpose.msra.mxu0 0.0
          %735 = vmatprep.subr.mxu0 0.0
          %736 = vmatpush2.xpose.msra.mxu0 0.0
          %737 = vmatprep.subr.mxu0 0.0
          %738 = vmatpush2.xpose.msra.mxu0 0.0
          %739 = vmatprep.subr.mxu0 0.0
          %740 = vmatpush2.xpose.msra.mxu0 0.0
          %741 = vmatprep.subr.mxu0 0.0
          %742 = vmatpush2.xpose.msra.mxu0 0.0
          %743 = vmatprep.mubr.f32.mxu0 0.0
          %744 = vmatmul.mubr.f32.gmra.mxu0 %v626
          %v745 = vpop.f32.mrf.mxu0
          %v746 = vadd.f32 0.0, %v745
          %v747 = vpop.f32.mrf.mxu0
          %748 = vmatprep.mubr.f32.mxu0 0.0
          %749 = vmatmul.mubr.f32.gmra.mxu0 %v629
          %v750 = vpop.f32.mrf.mxu0
          %v751 = vadd.f32 0.0, %v750
          %v752 = vpop.f32.mrf.mxu0
          %753 = vdwg.mxu0
          %v754 = vadd.f32 %v604, %v746
          %v755 = vadd.f32 %v605, %v751
          %756 = vst [vmem:[#allocation2] sm:$0xff] %v754
          %757 = vst [vmem:[#allocation2 + $0x8] sm:$0xff] %v755
        $region52: #{tpu_custom_call.1} parent=39 // pred_fallthru
          _
        // Predicated region
        $region53: #{tpu_custom_call.1} parent=39 // pred_check
          %p758 = pneg %p437
        $region54: #{tpu_custom_call.1} parent=39 // pred_check_branch
          %760 = sbr.rel (%p758) target = $region56
        $region55: #{tpu_custom_call.1} parent=39 // pred_region
          %v761 = vld [vmem:[%s423] sm:$0x1]
          %v762 = vld [vmem:[%s431] sm:$0x1]
          %s763 = scalar_select %p436, 1, 0
          %v764 = vstv %s763
          %vm765 = vcmp.eq.s32.totalorder %v764, 1
          %v766 = vsel %vm765, %v761, %v762
          %v767 = vld [vmem:[#allocation2] sm:$0xff]
          %v768 = vld [vmem:[#allocation2 + $0x8] sm:$0xff]
          %v770 = vlaneseq
          %v771 = vshrl.u32 %v770, 7
          %v772 = vsub.s32 0, %v771
          %v773 = vrot.slane %v766, %v772
          %v775 = vadd.f32 %v767, %v773
          %v776 = vadd.f32 %v768, %v773
          %777 = vst [vmem:[%s377] sm:$0xff] %v775
          %778 = vst [vmem:[%s377 + $0x8] sm:$0xff] %v776
        $region56: #{tpu_custom_call.1} parent=39 // pred_fallthru
          _
        %s779 = sand.u32 %s208, 1
        %s780 = scalar_lea.sflag [#allocation4], %s779
        %s781 = sand.u32 %s208, 1
        %s782 = smul.addr %s781, 16
        %s783 = scalar_lea.vmem [#allocation3], %s782
        // Predicated region
        $region57: #{tpu_custom_call.1} parent=39 // pred_check
          %p784 = pneg %p218
        $region58: #{tpu_custom_call.1} parent=39 // pred_check_branch
          %786 = sbr.rel (%p784) target = $region60
        $region59: #{tpu_custom_call.1} parent=39 // pred_region
          %s787 = smul.u32 2, %s24
          %s789 = ssub.s32 256, 256
          %790 = vsyncadd %s780, %s789
          %s791 = smul.addr %s787, 2
          %s792 = sadd.s32 %s25, %s791
          %s793 = smul.addr %s792, 128
          %s794 = scalar_lea.hbm %s5, %s793
          %s795 = sshll.u32 %s783, 4
          %s796 = int_to_ptr.vmem [resolvable:$true] %s795
          %801 = dma.vmem_to_hbm [thread:$0]  %s796, 256, %s794, %s780, 128, 256, 8
        $region60: #{tpu_custom_call.1} parent=39 // pred_fallthru
          _
      $region40: #{tpu_custom_call.1} parent=5 // pred_fallthru
        _
      %p802 = scmp.le.s32.totalorder 2, %s14
      // Predicated region
      $region61: #{tpu_custom_call.1} parent=5 // pred_check
        %p803 = pneg %p802
      $region62: #{tpu_custom_call.1} parent=5 // pred_check_branch
        %805 = sbr.rel (%p803) target = $region64
      $region63: #{tpu_custom_call.1} parent=5 // pred_region
        %s806 = ssub.s32 %s14, 2
        // Predicated region
        $region65: #{tpu_custom_call.1} parent=63 // pred_check
          %p807 = pneg %p224
        $region66: #{tpu_custom_call.1} parent=63 // pred_check_branch
          %809 = sbr.rel (%p807) target = $region68
        $region67: #{tpu_custom_call.1} parent=63 // pred_region
          %s810 = sand.u32 %s209, 1
          %s811 = scalar_lea.sflag [#allocation4], %s810
          %s812 = sand.u32 %s209, 1
          %s813 = smul.addr %s812, 16
          %s814 = scalar_lea.vmem [#allocation3], %s813
          %815 = dma.done %s811, 256
        $region68: #{tpu_custom_call.1} parent=63 // pred_fallthru
          _
      $region64: #{tpu_custom_call.1} parent=5 // pred_fallthru
        _
    $region6: #{tpu_custom_call.1} parent=1 // loop_footer
      %s18 = sadd.s32 1, %s14
    $region7: #{tpu_custom_call.1} parent=1 // loop_footer_branch
      %13 = sbr.rel target = $region3
    $region8: #{tpu_custom_call.1} parent=1 // loop_exit
      _
    %816 = vsyncpa [#allocation4], 1
    %s817 = scalar_lea.sflag [#allocation4], 1
    %818 = vsyncpa %s817, 1

</llo_original>
